<compile_context>
chip_gen: v6e
topology: v6e:2x2x1
jax: 0.10.0
libtpu: 0.0.40
codegen_flags: <defaults>
</compile_context>

<pallas_src>
import jax
import jax.numpy as jnp
from jax.experimental import pallas as pl
from jax.experimental.pallas import tpu as pltpu


def _embedding_full_kernel(
    x1_ref, x2_ref,      # (B, D_in)
    wc1_ref, wc2_ref,    # (D_in, H) folded: We @ W1[:E], We @ W1[E:]
    bc_ref,              # (1, H)    folded: be @ W1[:E] + be @ W1[E:] + b1
    w2_ref, b2_ref,      # (H, A), (1, A)
    out_ref,             # (B, A)
):
    # fcl1 on concat(embed(x1), embed(x2)) with the embedding folded into the
    # weights: concat(s1,s2) @ W1 == x1 @ Wc1 + x2 @ Wc2 (+ folded bias).
    h = (jnp.dot(x1_ref[...], wc1_ref[...], preferred_element_type=jnp.float32)
         + jnp.dot(x2_ref[...], wc2_ref[...], preferred_element_type=jnp.float32)
         + bc_ref[...])
    h = jnp.maximum(h, 0.0)  # relu

    # fcl2
    logits = jnp.dot(h, w2_ref[...], preferred_element_type=jnp.float32) + b2_ref[...]

    # softmax over dim=1 (the action/lane dimension); reciprocal on EUP.
    m = jnp.max(logits, axis=1, keepdims=True)
    e = jnp.exp(logits - m)
    out_ref[...] = e * pl.reciprocal(jnp.sum(e, axis=1, keepdims=True), approx=True)


def fold_params(params):
    """One-time (outside hot path) algebraic fold of the linear embedding into fcl1."""
    we, be, w1, b1, w2, b2 = (params[k] for k in ("we", "be", "w1", "b1", "w2", "b2"))
    E = we.shape[1]
    w1a, w1b = w1[:E], w1[E:]
    wc1 = we @ w1a                                   # (D_in, H)
    wc2 = we @ w1b                                   # (D_in, H)
    bc = be @ w1a + be @ w1b + b1                    # (H,)
    return {
        "wc1": wc1,
        "wc2": wc2,
        "bc": bc.reshape(1, -1),
        "w2": w2,
        "b2": b2.reshape(1, -1),
    }


def embedding_full_forward(x1, x2, folded):
    """x1, x2: (B, D_in) float32. folded: output of fold_params. Returns (B, A) probs."""
    wc1, wc2, bc, w2, b2 = (folded[k] for k in ("wc1", "wc2", "bc", "w2", "b2"))
    B, D = x1.shape
    H = wc1.shape[1]
    A = w2.shape[1]

    flops = 2 * B * D * H * 2 + 2 * B * H * A        # 3 matmuls (f32 MACs*2)
    transcendentals = B * A                          # exp in softmax
    bytes_accessed = 4 * (x1.size + x2.size + wc1.size + wc2.size
                          + bc.size + w2.size + b2.size + B * A)

    vmem = pl.BlockSpec(memory_space=pltpu.MemorySpace.VMEM)
    return pl.pallas_call(
        _embedding_full_kernel,
        out_shape=jax.ShapeDtypeStruct((B, A), jnp.float32),
        in_specs=[vmem] * 7,
        out_specs=vmem,
        cost_estimate=pl.CostEstimate(
            flops=flops,
            transcendentals=transcendentals,
            bytes_accessed=bytes_accessed,
        ),
    )(x1, x2, wc1, wc2, bc, w2, b2)


def _init_params(key, d_in, emb_size, hidden, n_actions):
    ks = jax.random.split(key, 6)
    scale = 0.05
    return {
        "we": scale * jax.random.normal(ks[0], (d_in, emb_size), jnp.float32),
        "be": scale * jax.random.normal(ks[1], (emb_size,), jnp.float32),
        "w1": scale * jax.random.normal(ks[2], (2 * emb_size, hidden), jnp.float32),
        "b1": scale * jax.random.normal(ks[3], (hidden,), jnp.float32),
        "w2": scale * jax.random.normal(ks[4], (hidden, n_actions), jnp.float32),
        "b2": scale * jax.random.normal(ks[5], (n_actions,), jnp.float32),
    }


def _reference(x1, x2, p):
    s1 = x1 @ p["we"] + p["be"]
    s2 = x2 @ p["we"] + p["be"]
    full = jnp.concatenate([s1, s2], axis=1)
    h = jnp.maximum(full @ p["w1"] + p["b1"], 0.0)
    return jax.nn.softmax(h @ p["w2"] + p["b2"], axis=1)


if __name__ == "__main__":
    B, D_IN, EMB, HID, N_ACT = 8, 32, 32, 128, 8

    key = jax.random.PRNGKey(0)
    k_x1, k_x2, k_p = jax.random.split(key, 3)
    x1 = jax.random.normal(k_x1, (B, D_IN), jnp.float32)
    x2 = jax.random.normal(k_x2, (B, D_IN), jnp.float32)
    params = _init_params(k_p, D_IN, EMB, HID, N_ACT)

    # One-time parameter fold (done outside the per-call hot path).
    folded = fold_params(params)

    out = embedding_full_forward(x1, x2, folded)
    out = jax.block_until_ready(out)

    ref = _reference(x1, x2, params)
    assert out.shape == (B, N_ACT)
    # Tolerances loosened for approx (EUP vrcp) reciprocal in the softmax.
    assert jnp.allclose(out, ref, atol=2e-3, rtol=2e-3)
    assert jnp.allclose(jnp.sum(out, axis=1), jnp.ones((B,)), atol=2e-3)

    print("KERNEL_OK")
</pallas_src>

<mosaic_0001>
module attributes {stable_mosaic.version = 11 : i64} {
  func.func @_embedding_full_kernel(%arg0: memref<8x32xf32, #tpu.memory_space<vmem>>, %arg1: memref<8x32xf32, #tpu.memory_space<vmem>>, %arg2: memref<32x128xf32, #tpu.memory_space<vmem>>, %arg3: memref<32x128xf32, #tpu.memory_space<vmem>>, %arg4: memref<1x128xf32, #tpu.memory_space<vmem>>, %arg5: memref<128x8xf32, #tpu.memory_space<vmem>>, %arg6: memref<1x8xf32, #tpu.memory_space<vmem>>, %arg7: memref<8x8xf32, #tpu.memory_space<vmem>>) attributes {dimension_semantics = [], scalar_prefetch = 0 : i64, scratch_operands = 0 : i64, tpu.core_type = #tpu.core_type<tc>} {
    %c0 = arith.constant 0 : index
    %c0_0 = arith.constant 0 : index
    %0 = vector.load %arg0[%c0, %c0_0] : memref<8x32xf32, #tpu.memory_space<vmem>>, vector<8x32xf32>
    %c0_1 = arith.constant 0 : index
    %c0_2 = arith.constant 0 : index
    %1 = vector.load %arg2[%c0_1, %c0_2] : memref<32x128xf32, #tpu.memory_space<vmem>>, vector<32x128xf32>
    %cst = arith.constant dense<0.000000e+00> : vector<8x128xf32>
    %2 = tpu.matmul %0, %1, %cst {dimension_numbers = #tpu.dot_dimension_numbers<[1], [0], [0], [1], [0, 0, 1, 1], [], []>} : vector<8x32xf32>, vector<32x128xf32>, vector<8x128xf32> -> vector<8x128xf32>
    %c0_3 = arith.constant 0 : index
    %c0_4 = arith.constant 0 : index
    %3 = vector.load %arg1[%c0_3, %c0_4] : memref<8x32xf32, #tpu.memory_space<vmem>>, vector<8x32xf32>
    %c0_5 = arith.constant 0 : index
    %c0_6 = arith.constant 0 : index
    %4 = vector.load %arg3[%c0_5, %c0_6] : memref<32x128xf32, #tpu.memory_space<vmem>>, vector<32x128xf32>
    %cst_7 = arith.constant dense<0.000000e+00> : vector<8x128xf32>
    %5 = tpu.matmul %3, %4, %cst_7 {dimension_numbers = #tpu.dot_dimension_numbers<[1], [0], [0], [1], [0, 0, 1, 1], [], []>} : vector<8x32xf32>, vector<32x128xf32>, vector<8x128xf32> -> vector<8x128xf32>
    %6 = arith.addf %2, %5 : vector<8x128xf32>
    %c0_8 = arith.constant 0 : index
    %c0_9 = arith.constant 0 : index
    %7 = vector.load %arg4[%c0_8, %c0_9] : memref<1x128xf32, #tpu.memory_space<vmem>>, vector<1x128xf32>
    %8 = vector.broadcast %7 : vector<1x128xf32> to vector<8x128xf32>
    %9 = arith.addf %6, %8 : vector<8x128xf32>
    %cst_10 = arith.constant 0.000000e+00 : f32
    %10 = vector.broadcast %cst_10 : f32 to vector<8x128xf32>
    %11 = arith.maximumf %9, %10 : vector<8x128xf32>
    %c0_11 = arith.constant 0 : index
    %c0_12 = arith.constant 0 : index
    %12 = vector.load %arg5[%c0_11, %c0_12] : memref<128x8xf32, #tpu.memory_space<vmem>>, vector<128x8xf32>
    %cst_13 = arith.constant dense<0.000000e+00> : vector<8x8xf32>
    %13 = tpu.matmul %11, %12, %cst_13 {dimension_numbers = #tpu.dot_dimension_numbers<[1], [0], [0], [1], [0, 0, 1, 1], [], []>} : vector<8x128xf32>, vector<128x8xf32>, vector<8x8xf32> -> vector<8x8xf32>
    %c0_14 = arith.constant 0 : index
    %c0_15 = arith.constant 0 : index
    %14 = vector.load %arg6[%c0_14, %c0_15] : memref<1x8xf32, #tpu.memory_space<vmem>>, vector<1x8xf32>
    %15 = vector.broadcast %14 : vector<1x8xf32> to vector<8x8xf32>
    %16 = arith.addf %13, %15 : vector<8x8xf32>
    %cst_16 = arith.constant dense<0xFF800000> : vector<8xf32>
    %17 = vector.multi_reduction <maximumf>, %16, %cst_16 [1] : vector<8x8xf32> to vector<8xf32>
    %18 = vector.shape_cast %17 : vector<8xf32> to vector<8x1xf32>
    %19 = vector.broadcast %18 : vector<8x1xf32> to vector<8x8xf32>
    %20 = arith.subf %16, %19 : vector<8x8xf32>
    %21 = math.exp %20 : vector<8x8xf32>
    %cst_17 = arith.constant dense<0.000000e+00> : vector<8xf32>
    %22 = vector.multi_reduction <add>, %21, %cst_17 [1] : vector<8x8xf32> to vector<8xf32>
    %23 = vector.shape_cast %22 : vector<8xf32> to vector<8x1xf32>
    %24 = tpu.reciprocal %23 {approx = true} : vector<8x1xf32> -> vector<8x1xf32>
    %25 = vector.broadcast %24 : vector<8x1xf32> to vector<8x8xf32>
    %26 = arith.mulf %21, %25 : vector<8x8xf32>
    %c0_18 = arith.constant 0 : index
    %c0_19 = arith.constant 0 : index
    %27 = vector.load %arg7[%c0_18, %c0_19] : memref<8x8xf32, #tpu.memory_space<vmem>>, vector<8x8xf32>
    tpu.vector_store %arg7[%c0_18, %c0_19], %26 {strides = array<i32>} : memref<8x8xf32, #tpu.memory_space<vmem>>, vector<8x8xf32>,
    return
  }
}

</mosaic_0001>

<llo_original>
// kernel: tpu_custom_call.1
$region0: #{tpu_custom_call.1}
  #allocation0 [shape = 'u32[]', space=smem, size = 0x4, offset = 0x4, fixed_abs, tag = 'smem constant byte address 0x4 - core index']
  #allocation1 [shape = 'u32[144,128]{1,0:T(1,128)}', space=vmem, size = 0x12000, scoped, tag = 'internal scratch']
  %s0 = inlined_call_operand.vmem [shape: f32[8,32], index: 0, kind: input, shape index: {}]
  %s1 = inlined_call_operand.vmem [shape: f32[8,32], index: 1, kind: input, shape index: {}]
  %s2 = inlined_call_operand.vmem [shape: f32[32,128], index: 2, kind: input, shape index: {}]
  %s3 = inlined_call_operand.vmem [shape: f32[32,128], index: 3, kind: input, shape index: {}]
  %s4 = inlined_call_operand.vmem [shape: f32[1,128], index: 4, kind: input, shape index: {}]
  %s5 = inlined_call_operand.vmem [shape: f32[128,8], index: 5, kind: input, shape index: {}]
  %s6 = inlined_call_operand.vmem [shape: f32[1,8], index: 6, kind: input, shape index: {}]
  %s7 = inlined_call_operand.hbm [shape: f32[8,8], index: 7, kind: output, shape index: {}]
  %s8 = sld [smem:[#allocation0]]
  $region38: #{tpu_custom_call.1} parent=0
    _
  %s10 = ssub.s32 1, %s8
  %s11 = scalar_select 0, %s10, %s8
  $region1: #{tpu_custom_call.1} parent=0
    #allocation2 [shape = 'u8[4096]{0}', space=vmem, size = 0x1000, scoped, tag = 'output window, operand 0, single buffered']
    #allocation3 [shape = 's32[1]{0}', space=sflag, size = 0x4, scoped, tag = 'scoped memory for tpu_custom_call.1']
    %12 = vsyncpa [#allocation3], 0
    // Predicated region
    $region2: #{tpu_custom_call.1} parent=1 // pred_check
      _
    $region3: #{tpu_custom_call.1} parent=1 // pred_check_branch
      %14 = sbr.rel (0) target = $region5
    $region4: #{tpu_custom_call.1} parent=1 // pred_region
      _
    $region5: #{tpu_custom_call.1} parent=1 // pred_fallthru
      _
    // Predicated region
    $region6: #{tpu_custom_call.1} parent=1 // pred_check
      _
    $region7: #{tpu_custom_call.1} parent=1 // pred_check_branch
      %16 = sbr.rel (0) target = $region9
    $region8: #{tpu_custom_call.1} parent=1 // pred_region
      _
    $region9: #{tpu_custom_call.1} parent=1 // pred_fallthru
      _
    // Predicated region
    $region10: #{tpu_custom_call.1} parent=1 // pred_check
      _
    $region11: #{tpu_custom_call.1} parent=1 // pred_check_branch
      %18 = sbr.rel (0) target = $region13
    $region12: #{tpu_custom_call.1} parent=1 // pred_region
      _
    $region13: #{tpu_custom_call.1} parent=1 // pred_fallthru
      _
    // Predicated region
    $region14: #{tpu_custom_call.1} parent=1 // pred_check
      _
    $region15: #{tpu_custom_call.1} parent=1 // pred_check_branch
      %20 = sbr.rel (0) target = $region17
    $region16: #{tpu_custom_call.1} parent=1 // pred_region
      _
    $region17: #{tpu_custom_call.1} parent=1 // pred_fallthru
      _
    // Predicated region
    $region18: #{tpu_custom_call.1} parent=1 // pred_check
      _
    $region19: #{tpu_custom_call.1} parent=1 // pred_check_branch
      %22 = sbr.rel (0) target = $region21
    $region20: #{tpu_custom_call.1} parent=1 // pred_region
      _
    $region21: #{tpu_custom_call.1} parent=1 // pred_fallthru
      _
    // Predicated region
    $region22: #{tpu_custom_call.1} parent=1 // pred_check
      _
    $region23: #{tpu_custom_call.1} parent=1 // pred_check_branch
      %24 = sbr.rel (0) target = $region25
    $region24: #{tpu_custom_call.1} parent=1 // pred_region
      _
    $region25: #{tpu_custom_call.1} parent=1 // pred_fallthru
      _
    // Predicated region
    $region26: #{tpu_custom_call.1} parent=1 // pred_check
      _
    $region27: #{tpu_custom_call.1} parent=1 // pred_check_branch
      %26 = sbr.rel (0) target = $region29
    $region28: #{tpu_custom_call.1} parent=1 // pred_region
      _
    $region29: #{tpu_custom_call.1} parent=1 // pred_fallthru
      _
    %v27 = vld [vmem:[%s0] sm:$0xff]
    %v28 = vld [vmem:[%s2] sm:$0xff]
    %v29 = vld [vmem:[%s2 + $0x8] sm:$0xff]
    %v30 = vld [vmem:[%s2 + $0x10] sm:$0xff]
    %v31 = vld [vmem:[%s2 + $0x18] sm:$0xff]
    %v32 = vld [vmem:[%s1] sm:$0xff]
    %v33 = vld [vmem:[%s3] sm:$0xff]
    %v34 = vld [vmem:[%s3 + $0x8] sm:$0xff]
    %v35 = vld [vmem:[%s3 + $0x10] sm:$0xff]
    %v36 = vld [vmem:[%s3 + $0x18] sm:$0xff]
    %vm37 = vcmask 261120
    %v39 = vsel %vm37, %v32, 0
    %41 = vmatprep.subr.mxu0 0.0
    %42 = vmatpush1.msra.mxu0 0.0
    %43 = vmatprep.subr.mxu0 0.0
    %44 = vmatpush1.msra.mxu0 0.0
    %45 = vmatprep.subr.mxu0 0.0
    %46 = vmatpush1.msra.mxu0 0.0
    %47 = vmatprep.subr.mxu0 0.0
    %48 = vmatpush1.msra.mxu0 0.0
    %49 = vmatprep.subr.mxu0 0.0
    %50 = vmatpush1.msra.mxu0 0.0
    %51 = vmatprep.subr.mxu0 0.0
    %52 = vmatpush1.msra.mxu0 0.0
    %53 = vmatprep.subr.mxu0 0.0
    %54 = vmatpush1.msra.mxu0 0.0
    %55 = vmatprep.subr.mxu0 0.0
    %56 = vmatpush1.msra.mxu0 0.0
    %57 = vmatprep.subr.mxu0 0.0
    %58 = vmatpush1.msra.mxu0 0.0
    %59 = vmatprep.subr.mxu0 0.0
    %60 = vmatpush1.msra.mxu0 0.0
    %61 = vmatprep.subr.mxu0 0.0
    %62 = vmatpush1.msra.mxu0 0.0
    %63 = vmatprep.subr.mxu0 0.0
    %64 = vmatpush1.msra.mxu0 0.0
    %65 = vmatprep.subr.mxu0 0.0
    %66 = vmatpush1.msra.mxu0 %v36
    %67 = vmatprep.subr.mxu0 0.0
    %68 = vmatpush1.msra.mxu0 %v35
    %69 = vmatprep.subr.mxu0 0.0
    %70 = vmatpush1.msra.mxu0 %v34
    %71 = vmatprep.subr.mxu0 0.0
    %72 = vmatpush1.msra.mxu0 %v33
    %73 = vmatprep.subr.mxu0 0.0
    %74 = vmatpush2.msra.mxu0 0.0
    %75 = vmatprep.subr.mxu0 0.0
    %76 = vmatpush2.msra.mxu0 0.0
    %77 = vmatprep.subr.mxu0 0.0
    %78 = vmatpush2.msra.mxu0 0.0
    %79 = vmatprep.subr.mxu0 0.0
    %80 = vmatpush2.msra.mxu0 0.0
    %81 = vmatprep.subr.mxu0 0.0
    %82 = vmatpush2.msra.mxu0 0.0
    %83 = vmatprep.subr.mxu0 0.0
    %84 = vmatpush2.msra.mxu0 0.0
    %85 = vmatprep.subr.mxu0 0.0
    %86 = vmatpush2.msra.mxu0 0.0
    %87 = vmatprep.subr.mxu0 0.0
    %88 = vmatpush2.msra.mxu0 0.0
    %89 = vmatprep.subr.mxu0 0.0
    %90 = vmatpush2.msra.mxu0 0.0
    %91 = vmatprep.subr.mxu0 0.0
    %92 = vmatpush2.msra.mxu0 0.0
    %93 = vmatprep.subr.mxu0 0.0
    %94 = vmatpush2.msra.mxu0 0.0
    %95 = vmatprep.subr.mxu0 0.0
    %96 = vmatpush2.msra.mxu0 0.0
    %97 = vmatprep.subr.mxu0 0.0
    %98 = vmatpush2.msra.mxu0 0.0
    %99 = vmatprep.subr.mxu0 0.0
    %100 = vmatpush2.msra.mxu0 0.0
    %101 = vmatprep.subr.mxu0 0.0
    %102 = vmatpush2.msra.mxu0 0.0
    %103 = vmatprep.subr.mxu0 0.0
    %104 = vmatpush2.msra.mxu0 0.0
    %105 = vmatprep.mubr.f32.mxu0 0.0
    %106 = vmatmul.mubr.f32.gmra.mxu0 %v39
    %v107 = vpop.f32.mrf.mxu0
    %v108 = vadd.f32 0.0, %v107
    %v109 = vpop.f32.mrf.mxu0
    %110 = vdwg.mxu0
    %v112 = vsel %vm37, %v27, 0
    %114 = vmatprep.subr.mxu0 0.0
    %115 = vmatpush1.msra.mxu0 0.0
    %116 = vmatprep.subr.mxu0 0.0
    %117 = vmatpush1.msra.mxu0 0.0
    %118 = vmatprep.subr.mxu0 0.0
    %119 = vmatpush1.msra.mxu0 0.0
    %120 = vmatprep.subr.mxu0 0.0
    %121 = vmatpush1.msra.mxu0 0.0
    %122 = vmatprep.subr.mxu0 0.0
    %123 = vmatpush1.msra.mxu0 0.0
    %124 = vmatprep.subr.mxu0 0.0
    %125 = vmatpush1.msra.mxu0 0.0
    %126 = vmatprep.subr.mxu0 0.0
    %127 = vmatpush1.msra.mxu0 0.0
    %128 = vmatprep.subr.mxu0 0.0
    %129 = vmatpush1.msra.mxu0 0.0
    %130 = vmatprep.subr.mxu0 0.0
    %131 = vmatpush1.msra.mxu0 0.0
    %132 = vmatprep.subr.mxu0 0.0
    %133 = vmatpush1.msra.mxu0 0.0
    %134 = vmatprep.subr.mxu0 0.0
    %135 = vmatpush1.msra.mxu0 0.0
    %136 = vmatprep.subr.mxu0 0.0
    %137 = vmatpush1.msra.mxu0 0.0
    %138 = vmatprep.subr.mxu0 0.0
    %139 = vmatpush1.msra.mxu0 %v31
    %140 = vmatprep.subr.mxu0 0.0
    %141 = vmatpush1.msra.mxu0 %v30
    %142 = vmatprep.subr.mxu0 0.0
    %143 = vmatpush1.msra.mxu0 %v29
    %144 = vmatprep.subr.mxu0 0.0
    %145 = vmatpush1.msra.mxu0 %v28
    %146 = vmatprep.subr.mxu0 0.0
    %147 = vmatpush2.msra.mxu0 0.0
    %148 = vmatprep.subr.mxu0 0.0
    %149 = vmatpush2.msra.mxu0 0.0
    %150 = vmatprep.subr.mxu0 0.0
    %151 = vmatpush2.msra.mxu0 0.0
    %152 = vmatprep.subr.mxu0 0.0
    %153 = vmatpush2.msra.mxu0 0.0
    %154 = vmatprep.subr.mxu0 0.0
    %155 = vmatpush2.msra.mxu0 0.0
    %156 = vmatprep.subr.mxu0 0.0
    %157 = vmatpush2.msra.mxu0 0.0
    %158 = vmatprep.subr.mxu0 0.0
    %159 = vmatpush2.msra.mxu0 0.0
    %160 = vmatprep.subr.mxu0 0.0
    %161 = vmatpush2.msra.mxu0 0.0
    %162 = vmatprep.subr.mxu0 0.0
    %163 = vmatpush2.msra.mxu0 0.0
    %164 = vmatprep.subr.mxu0 0.0
    %165 = vmatpush2.msra.mxu0 0.0
    %166 = vmatprep.subr.mxu0 0.0
    %167 = vmatpush2.msra.mxu0 0.0
    %168 = vmatprep.subr.mxu0 0.0
    %169 = vmatpush2.msra.mxu0 0.0
    %170 = vmatprep.subr.mxu0 0.0
    %171 = vmatpush2.msra.mxu0 0.0
    %172 = vmatprep.subr.mxu0 0.0
    %173 = vmatpush2.msra.mxu0 0.0
    %174 = vmatprep.subr.mxu0 0.0
    %175 = vmatpush2.msra.mxu0 0.0
    %176 = vmatprep.subr.mxu0 0.0
    %177 = vmatpush2.msra.mxu0 0.0
    %178 = vmatprep.mubr.f32.mxu0 0.0
    %179 = vmatmul.mubr.f32.gmra.mxu0 %v112
    %v180 = vpop.f32.mrf.mxu0
    %v181 = vadd.f32 %v108, %v180
    %v182 = vpop.f32.mrf.mxu0
    %183 = vdwg.mxu0
    %v184 = vld [vmem:[%s4] sm:$0x1]
    %v186 = vlaneseq
    %v187 = vshrl.u32 %v186, 7
    %v188 = vsub.s32 0, %v187
    %v189 = vrot.slane %v184, %v188
    %v191 = vadd.f32 %v181, %v189
    %v192 = vmax.f32 %v191, 0.0
    %v193 = vld [vmem:[%s5] sm:$0xff]
    %v194 = vld [vmem:[%s5 + $0x8] sm:$0xff]
    %v195 = vld [vmem:[%s5 + $0x10] sm:$0xff]
    %v196 = vld [vmem:[%s5 + $0x18] sm:$0xff]
    %v197 = vld [vmem:[%s5 + $0x20] sm:$0xff]
    %v198 = vld [vmem:[%s5 + $0x28] sm:$0xff]
    %v199 = vld [vmem:[%s5 + $0x30] sm:$0xff]
    %v200 = vld [vmem:[%s5 + $0x38] sm:$0xff]
    %v201 = vld [vmem:[%s5 + $0x40] sm:$0xff]
    %v202 = vld [vmem:[%s5 + $0x48] sm:$0xff]
    %v203 = vld [vmem:[%s5 + $0x50] sm:$0xff]
    %v204 = vld [vmem:[%s5 + $0x58] sm:$0xff]
    %v205 = vld [vmem:[%s5 + $0x60] sm:$0xff]
    %v206 = vld [vmem:[%s5 + $0x68] sm:$0xff]
    %v207 = vld [vmem:[%s5 + $0x70] sm:$0xff]
    %v208 = vld [vmem:[%s5 + $0x78] sm:$0xff]
    %v209 = vld [vmem:[%s6] sm:$0x1]
    %v211 = vlaneseq
    %v212 = vshrl.u32 %v211, 7
    %v213 = vsub.s32 0, %v212
    %v214 = vrot.slane %v209, %v213
    %216 = vmatprep.subr.mxu0 0.0
    %217 = vmatpush1.msra.mxu0 %v208
    %218 = vmatprep.subr.mxu0 0.0
    %219 = vmatpush1.msra.mxu0 %v207
    %220 = vmatprep.subr.mxu0 0.0
    %221 = vmatpush1.msra.mxu0 %v206
    %222 = vmatprep.subr.mxu0 0.0
    %223 = vmatpush1.msra.mxu0 %v205
    %224 = vmatprep.subr.mxu0 0.0
    %225 = vmatpush1.msra.mxu0 %v204
    %226 = vmatprep.subr.mxu0 0.0
    %227 = vmatpush1.msra.mxu0 %v203
    %228 = vmatprep.subr.mxu0 0.0
    %229 = vmatpush1.msra.mxu0 %v202
    %230 = vmatprep.subr.mxu0 0.0
    %231 = vmatpush1.msra.mxu0 %v201
    %232 = vmatprep.subr.mxu0 0.0
    %233 = vmatpush1.msra.mxu0 %v200
    %234 = vmatprep.subr.mxu0 0.0
    %235 = vmatpush1.msra.mxu0 %v199
    %236 = vmatprep.subr.mxu0 0.0
    %237 = vmatpush1.msra.mxu0 %v198
    %238 = vmatprep.subr.mxu0 0.0
    %239 = vmatpush1.msra.mxu0 %v197
    %240 = vmatprep.subr.mxu0 0.0
    %241 = vmatpush1.msra.mxu0 %v196
    %242 = vmatprep.subr.mxu0 0.0
    %243 = vmatpush1.msra.mxu0 %v195
    %244 = vmatprep.subr.mxu0 0.0
    %245 = vmatpush1.msra.mxu0 %v194
    %246 = vmatprep.subr.mxu0 0.0
    %247 = vmatpush1.msra.mxu0 %v193
    %248 = vmatprep.subr.mxu0 0.0
    %249 = vmatpush2.msra.mxu0 0.0
    %250 = vmatprep.subr.mxu0 0.0
    %251 = vmatpush2.msra.mxu0 0.0
    %252 = vmatprep.subr.mxu0 0.0
    %253 = vmatpush2.msra.mxu0 0.0
    %254 = vmatprep.subr.mxu0 0.0
    %255 = vmatpush2.msra.mxu0 0.0
    %256 = vmatprep.subr.mxu0 0.0
    %257 = vmatpush2.msra.mxu0 0.0
    %258 = vmatprep.subr.mxu0 0.0
    %259 = vmatpush2.msra.mxu0 0.0
    %260 = vmatprep.subr.mxu0 0.0
    %261 = vmatpush2.msra.mxu0 0.0
    %262 = vmatprep.subr.mxu0 0.0
    %263 = vmatpush2.msra.mxu0 0.0
    %264 = vmatprep.subr.mxu0 0.0
    %265 = vmatpush2.msra.mxu0 0.0
    %266 = vmatprep.subr.mxu0 0.0
    %267 = vmatpush2.msra.mxu0 0.0
    %268 = vmatprep.subr.mxu0 0.0
    %269 = vmatpush2.msra.mxu0 0.0
    %270 = vmatprep.subr.mxu0 0.0
    %271 = vmatpush2.msra.mxu0 0.0
    %272 = vmatprep.subr.mxu0 0.0
    %273 = vmatpush2.msra.mxu0 0.0
    %274 = vmatprep.subr.mxu0 0.0
    %275 = vmatpush2.msra.mxu0 0.0
    %276 = vmatprep.subr.mxu0 0.0
    %277 = vmatpush2.msra.mxu0 0.0
    %278 = vmatprep.subr.mxu0 0.0
    %279 = vmatpush2.msra.mxu0 0.0
    %280 = vmatprep.mubr.f32.mxu0 0.0
    %281 = vmatmul.mubr.f32.gmra.mxu0 %v192
    %v282 = vpop.f32.mrf.mxu0
    %v283 = vadd.f32 %v214, %v282
    %v284 = vpop.f32.mrf.mxu0
    %285 = vdwg.mxu0
    %vm286 = vcmask 64512
    %v287 = vsel %vm286, %v283, -inf
    %288 = vmax.xlane.f32.xlu0 %v287
    %v289 = vpop.xlane.xlu0 %288
    %v290 = vsub.f32 %v283, %v289
    %v291 = vmul.f32 %v290, 1.442695
    %v292 = vpow.pop %v291
    %v293 = vsel %vm286, %v292, 0.0
    %294 = vadd.xlane.f32.xlu0 %v293
    %v295 = vpop.xlane.xlu0 %294
    %v296 = vrcp.pop %v295
    %v297 = vmul.f32 %v292, %v296
    %298 = vst.msk [vmem:[#allocation2] sm:$0xff] %vm286, %v297
    // Predicated region
    $region30: #{tpu_custom_call.1} parent=1 // pred_check
      _
    $region31: #{tpu_custom_call.1} parent=1 // pred_check_branch
      %300 = sbr.rel (0) target = $region33
    $region32: #{tpu_custom_call.1} parent=1 // pred_region
      %s302 = ssub.s32 128, 128
      %303 = vsyncadd [#allocation3], %s302
      %s305 = sshll.u32 [#allocation2], 4
      %s306 = int_to_ptr.vmem [resolvable:$true] %s305
      %308 = dma.vmem_to_hbm [thread:$0]  %s306, 128, %s7, [#allocation3]
    $region33: #{tpu_custom_call.1} parent=1 // pred_fallthru
      _
    // Predicated region
    $region34: #{tpu_custom_call.1} parent=1 // pred_check
      _
    $region35: #{tpu_custom_call.1} parent=1 // pred_check_branch
      %310 = sbr.rel (0) target = $region37
    $region36: #{tpu_custom_call.1} parent=1 // pred_region
      %311 = dma.done [#allocation3], 128
    $region37: #{tpu_custom_call.1} parent=1 // pred_fallthru
      _
    %312 = vsyncpa [#allocation3], 1

</llo_original>
